<compile_context>
chip_gen: v6e
topology: v6e:2x2x1
jax: 0.10.0
libtpu: 0.0.40
codegen_flags: <defaults>
</compile_context>

<pallas_src>
import jax
import jax.numpy as jnp
from jax import lax
from jax.experimental import pallas as pl
from jax.experimental.pallas import tpu as pltpu

_NCORES = 2                              # leading parallel axis -> both v7x TCs busy
_TARGET_BLOCK_BYTES = 2 * 1024 * 1024    # logits+labels streamed per grid step
_LANES = 128


def _cdiv(a, b):
    return -(-a // b)


def _round_down(x, m):
    return (x // m) * m


def _make_kernel(C, c_blk, r_tile, chunk, n_chunks, num_t, tiles_per_core,
                 hw_valid, needs_mask, unroll):
    """Builds the ComboLoss accumulation kernel for a static configuration."""

    def kernel(outs_ref, labels_ref, bce_ref, pos_ref):
        core = pl.program_id(0)
        t = pl.program_id(2)

        # Init the per-(core, batch) resident accumulators at the first tile.
        @pl.when(t == 0)
        def _():
            bce_ref[...] = jnp.zeros_like(bce_ref)
            pos_ref[...] = jnp.zeros_like(pos_ref)

        tile_idx = core * tiles_per_core + t
        tile_row0 = tile_idx * r_tile

        # Skip dead steps (tail of the 2-core split when num_t is small/odd).
        @pl.when(tile_idx < num_t)
        def _():
            def chunk_body(k, carry):
                bce_acc, pos_acc = carry
                if n_chunks == 1:
                    rows = slice(None)                       # static full extent
                else:
                    rows = pl.ds(pl.multiple_of(k * chunk, chunk), chunk)

                lab = labels_ref[0, rows, :].astype(jnp.int32)      # (chunk, 128)
                lab_c = jnp.clip(lab, 0, C - 1)

                # Stable BCE-with-logits vs one-hot, summed over classes:
                #   max(x,0) + log1p(exp(-|x|)) - x * [cls == label]
                # Classes processed in sub-blocks of <= 8 to bound vreg pressure.
                bce_c = jnp.zeros((chunk, _LANES), jnp.float32)
                for c0 in range(0, C, c_blk):
                    g = min(c_blk, C - c0)
                    x = outs_ref[0, c0:c0 + g, rows, :].astype(jnp.float32)
                    cls = c0 + lax.broadcasted_iota(jnp.int32, (g, chunk, _LANES), 0)
                    hit = cls == lab_c[None, :, :]
                    bce = (jnp.maximum(x, 0.0)
                           + jnp.log1p(jnp.exp(-jnp.abs(x)))
                           - jnp.where(hit, x, jnp.float32(0.0)))
                    bce_c = bce_c + jnp.sum(bce, axis=0)

                pos = (lab > 0).astype(jnp.int32)   # labels assumed >= 0 (class ids)

                if needs_mask:
                    # Mask padded / out-of-range tail positions.
                    sub = lax.broadcasted_iota(jnp.int32, (chunk, _LANES), 0)
                    lane = lax.broadcasted_iota(jnp.int32, (chunk, _LANES), 1)
                    flat = (tile_row0 + k * chunk + sub) * _LANES + lane
                    valid = flat < hw_valid
                    bce_c = jnp.where(valid, bce_c, jnp.float32(0.0))
                    pos = jnp.where(valid, pos, 0)

                return bce_acc + bce_c, pos_acc + pos

            init = (jnp.zeros((chunk, _LANES), jnp.float32),
                    jnp.zeros((chunk, _LANES), jnp.int32))
            if n_chunks == 1:
                bce_sum, pos_sum = chunk_body(0, init)
            else:
                bce_sum, pos_sum = lax.fori_loop(0, n_chunks, chunk_body, init,
                                                 unroll=unroll)

            bce_ref[0, 0] += bce_sum
            pos_ref[0, 0] += pos_sum

    return kernel


def combo_loss(outs, labels, fc=None, gamma=2, weight=None):
    """Pallas implementation of ComboLoss.forward.

    outs:   (N, C, H, W) float logits (f32 or bf16; fed at native HBM width)
    labels: (N, H, W)    integer class indices (>= 0)
    fc:     optional (N, 1) float logits for the auxiliary head
    gamma / weight are unused by the reference forward (kept for parity).
    """
    N, C, H, W = outs.shape
    HW = H * W

    outs_flat = outs.reshape(N, C, HW)
    labels_flat = labels.reshape(N, HW)

    # Lane-align the flattened spatial axis (no-op when already aligned).
    pad = (-HW) % _LANES
    if pad:
        outs_flat = jnp.pad(outs_flat, ((0, 0), (0, 0), (0, pad)))
        labels_flat = jnp.pad(labels_flat, ((0, 0), (0, pad)))
    R = (HW + pad) // _LANES

    # Sublane-dense views: (N, C, R, 128) logits, (N, R, 128) labels.
    outs4 = outs_flat.reshape(N, C, R, _LANES)
    labels3 = labels_flat.reshape(N, R, _LANES)

    # Bytes-based row tile: ~_TARGET_BLOCK_BYTES of logits+labels per grid step.
    row_bytes = _LANES * (C * outs.dtype.itemsize + labels.dtype.itemsize)
    if R < 8:
        r_tile = R                  # full-extent block (allowed by (8,128) rule)
        chunk = R
    else:
        r_tile = max(8, min(_round_down(_TARGET_BLOCK_BYTES // row_bytes, 8),
                            _round_down(R, 8)))
        chunk = 8
    n_chunks = _cdiv(r_tile, chunk)
    num_t = _cdiv(R, r_tile)
    tiles_per_core = _cdiv(num_t, _NCORES)
    needs_mask = (num_t * r_tile * _LANES) != HW

    c_blk = min(C, 8)
    unroll = max(1, min(4, 8 // c_blk, n_chunks))

    kernel = _make_kernel(C, c_blk, r_tile, chunk, n_chunks, num_t,
                          tiles_per_core, HW, needs_mask, unroll)

    def _rows_idx(core, t):
        # Dead steps (tile_idx >= num_t) are clamped to a valid block; the
        # kernel skips their accumulation via pl.when.
        return jnp.minimum(core * tiles_per_core + t, num_t - 1)

    n_logits = N * C * HW
    cost = pl.CostEstimate(
        flops=8 * n_logits,
        transcendentals=2 * n_logits,
        bytes_accessed=(outs.size * outs.dtype.itemsize
                        + labels.size * labels.dtype.itemsize
                        + 2 * _NCORES * N * chunk * _LANES * 4),
    )

    bce_acc, pos_acc = pl.pallas_call(
        kernel,
        out_shape=(
            jax.ShapeDtypeStruct((_NCORES, N, chunk, _LANES), jnp.float32),
            jax.ShapeDtypeStruct((_NCORES, N, chunk, _LANES), jnp.int32),
        ),
        grid_spec=pltpu.PrefetchScalarGridSpec(
            num_scalar_prefetch=0,
            grid=(_NCORES, N, tiles_per_core),
            in_specs=[
                pl.BlockSpec((1, C, r_tile, _LANES),
                             lambda c, n, t: (n, 0, _rows_idx(c, t), 0)),
                pl.BlockSpec((1, r_tile, _LANES),
                             lambda c, n, t: (n, _rows_idx(c, t), 0)),
            ],
            out_specs=(
                pl.BlockSpec((1, 1, chunk, _LANES), lambda c, n, t: (c, n, 0, 0)),
                pl.BlockSpec((1, 1, chunk, _LANES), lambda c, n, t: (c, n, 0, 0)),
            ),
        ),
        compiler_params=pltpu.CompilerParams(
            dimension_semantics=("parallel", "parallel", "arbitrary"),
            vmem_limit_bytes=32 * 1024 * 1024,
        ),
        cost_estimate=cost,
    )(outs4, labels3)

    # Final tiny reductions in XLA.
    loss = 256.0 * jnp.sum(bce_acc) / jnp.float32(N * C * H * W)

    if fc is not None:
        pos_per_batch = jnp.sum(pos_acc, axis=(0, 2, 3))            # (N,)
        labels_fc = (pos_per_batch > 0).astype(jnp.float32).reshape(N, 1)
        f = fc.astype(jnp.float32)
        fc_bce = (jnp.maximum(f, 0.0) - f * labels_fc
                  + jnp.log1p(jnp.exp(-jnp.abs(f))))
        loss = loss + jnp.mean(fc_bce)

    return loss


def _combo_loss_ref(outs, labels, fc=None):
    """Pure-JAX reference mirroring the PyTorch forward."""
    N, C, H, W = outs.shape
    lab = jnp.clip(labels, 0, C - 1)
    masks = jax.nn.one_hot(lab, C, axis=1, dtype=jnp.float32)       # (N,C,H,W)
    x = outs.astype(jnp.float32)
    bce = jnp.maximum(x, 0.0) - x * masks + jnp.log1p(jnp.exp(-jnp.abs(x)))
    loss = 256.0 * jnp.mean(bce)
    if fc is not None:
        labels_fc = (labels.reshape(N, -1).sum(-1) > 0).astype(jnp.float32)
        labels_fc = labels_fc.reshape(N, 1)
        f = fc.astype(jnp.float32)
        fc_bce = jnp.maximum(f, 0.0) - f * labels_fc + jnp.log1p(jnp.exp(-jnp.abs(f)))
        loss = loss + jnp.mean(fc_bce)
    return loss


if __name__ == "__main__":
    key = jax.random.PRNGKey(0)
    k1, k2, k3 = jax.random.split(key, 3)

    N, C, H, W = 2, 4, 32, 32
    outs = jax.random.normal(k1, (N, C, H, W), dtype=jnp.float32)
    labels = jax.random.randint(k2, (N, H, W), 0, C, dtype=jnp.int32)
    fc = jax.random.normal(k3, (N, 1), dtype=jnp.float32)

    # f32 + fc head
    loss = jax.block_until_ready(combo_loss(outs, labels, fc=fc))
    ref = jax.block_until_ready(_combo_loss_ref(outs, labels, fc=fc))
    assert jnp.allclose(loss, ref, rtol=1e-4, atol=1e-4), (loss, ref)

    # fc=None branch
    loss2 = jax.block_until_ready(combo_loss(outs, labels, fc=None))
    ref2 = jax.block_until_ready(_combo_loss_ref(outs, labels, fc=None))
    assert jnp.allclose(loss2, ref2, rtol=1e-4, atol=1e-4), (loss2, ref2)

    # bf16 logits flow through at native HBM width (kernel upcasts internally)
    outs_bf16 = outs.astype(jnp.bfloat16)
    loss3 = jax.block_until_ready(combo_loss(outs_bf16, labels, fc=fc))
    ref3 = jax.block_until_ready(_combo_loss_ref(outs_bf16, labels, fc=fc))
    assert jnp.allclose(loss3, ref3, rtol=1e-3, atol=1e-3), (loss3, ref3)

    # non-128-aligned spatial extent exercises the padded-tail masking path
    H2 = W2 = 24
    outs_m = jax.random.normal(k1, (N, C, H2, W2), dtype=jnp.float32)
    labels_m = jax.random.randint(k2, (N, H2, W2), 0, C, dtype=jnp.int32)
    loss4 = jax.block_until_ready(combo_loss(outs_m, labels_m, fc=fc))
    ref4 = jax.block_until_ready(_combo_loss_ref(outs_m, labels_m, fc=fc))
    assert jnp.allclose(loss4, ref4, rtol=1e-4, atol=1e-4), (loss4, ref4)

    # larger spatial extent exercises the chunked fori_loop (dynamic-slice) path
    outs_b = jax.random.normal(k1, (1, 2, 128, 128), dtype=jnp.float32)
    labels_b = jax.random.randint(k2, (1, 128, 128), 0, 2, dtype=jnp.int32)
    loss5 = jax.block_until_ready(combo_loss(outs_b, labels_b, fc=None))
    ref5 = jax.block_until_ready(_combo_loss_ref(outs_b, labels_b, fc=None))
    assert jnp.allclose(loss5, ref5, rtol=1e-4, atol=1e-4), (loss5, ref5)

    print("KERNEL_OK")
</pallas_src>

<mosaic_0001>
module attributes {stable_mosaic.version = 11 : i64} {
  func.func @kernel(%arg0: i32, %arg1: i32, %arg2: i32, %arg3: memref<1x4x8x128xf32, #tpu.memory_space<vmem>>, %arg4: memref<1x8x128xi32, #tpu.memory_space<vmem>>, %arg5: memref<1x1x8x128xf32, #tpu.memory_space<vmem>>, %arg6: memref<1x1x8x128xi32, #tpu.memory_space<vmem>>) attributes {dimension_semantics = [#tpu.dimension_semantics<parallel>, #tpu.dimension_semantics<parallel>, #tpu.dimension_semantics<arbitrary>], iteration_bounds = array<i64: 2, 2, 1>, scalar_prefetch = 0 : i64, scratch_operands = 0 : i64, tpu.core_type = #tpu.core_type<tc>, window_params = [{transform_indices = @transform_0, window_bounds = array<i64: 1, 4, 8, 128>}, {transform_indices = @transform_1, window_bounds = array<i64: 1, 8, 128>}, {transform_indices = @transform_2, window_bounds = array<i64: 1, 1, 8, 128>}, {transform_indices = @transform_3, window_bounds = array<i64: 1, 1, 8, 128>}]} {
    %c0_i32 = arith.constant 0 : i32
    %0 = arith.cmpi eq, %arg2, %c0_i32 : i32
    %1 = arith.extui %0 : i1 to i32
    %c0_i32_0 = arith.constant 0 : i32
    %2 = arith.cmpi ne, %1, %c0_i32_0 : i32
    scf.if %2 {
      %cst = arith.constant 0.000000e+00 : f32
      %8 = vector.broadcast %cst : f32 to vector<1x1x8x128xf32>
      %c0 = arith.constant 0 : index
      %c0_3 = arith.constant 0 : index
      %c0_4 = arith.constant 0 : index
      %c0_5 = arith.constant 0 : index
      %9 = vector.load %arg5[%c0, %c0_3, %c0_4, %c0_5] : memref<1x1x8x128xf32, #tpu.memory_space<vmem>>, vector<1x1x8x128xf32>
      tpu.vector_store %arg5[%c0, %c0_3, %c0_4, %c0_5], %8 {strides = array<i32>} : memref<1x1x8x128xf32, #tpu.memory_space<vmem>>, vector<1x1x8x128xf32>,
      %c0_i32_6 = arith.constant 0 : i32
      %10 = vector.broadcast %c0_i32_6 : i32 to vector<1x1x8x128xi32>
      %c0_7 = arith.constant 0 : index
      %c0_8 = arith.constant 0 : index
      %c0_9 = arith.constant 0 : index
      %c0_10 = arith.constant 0 : index
      %11 = vector.load %arg6[%c0_7, %c0_8, %c0_9, %c0_10] : memref<1x1x8x128xi32, #tpu.memory_space<vmem>>, vector<1x1x8x128xi32>
      tpu.vector_store %arg6[%c0_7, %c0_8, %c0_9, %c0_10], %10 {strides = array<i32>} : memref<1x1x8x128xi32, #tpu.memory_space<vmem>>, vector<1x1x8x128xi32>,
    } else {
    }
    %c1_i32 = arith.constant 1 : i32
    %3 = arith.muli %arg0, %c1_i32 : i32
    %4 = arith.addi %3, %arg2 : i32
    %c1_i32_1 = arith.constant 1 : i32
    %5 = arith.cmpi slt, %4, %c1_i32_1 : i32
    %6 = arith.extui %5 : i1 to i32
    %c0_i32_2 = arith.constant 0 : i32
    %7 = arith.cmpi ne, %6, %c0_i32_2 : i32
    scf.if %7 {
      %cst = arith.constant 0.000000e+00 : f32
      %8 = vector.broadcast %cst : f32 to vector<8x128xf32>
      %c0_i32_3 = arith.constant 0 : i32
      %9 = vector.broadcast %c0_i32_3 : i32 to vector<8x128xi32>
      %c0 = arith.constant 0 : index
      %c0_4 = arith.constant 0 : index
      %c0_5 = arith.constant 0 : index
      %10 = vector.load %arg4[%c0, %c0_4, %c0_5] : memref<1x8x128xi32, #tpu.memory_space<vmem>>, vector<1x8x128xi32>
      %11 = vector.shape_cast %10 : vector<1x8x128xi32> to vector<8x128xi32>
      %c0_i32_6 = arith.constant 0 : i32
      %c3_i32 = arith.constant 3 : i32
      %12 = vector.broadcast %c0_i32_6 : i32 to vector<8x128xi32>
      %13 = arith.maxsi %12, %11 : vector<8x128xi32>
      %14 = vector.broadcast %c3_i32 : i32 to vector<8x128xi32>
      %15 = arith.minsi %14, %13 : vector<8x128xi32>
      %cst_7 = arith.constant 0.000000e+00 : f32
      %16 = vector.broadcast %cst_7 : f32 to vector<8x128xf32>
      %c0_8 = arith.constant 0 : index
      %c0_9 = arith.constant 0 : index
      %c0_10 = arith.constant 0 : index
      %c0_11 = arith.constant 0 : index
      %17 = vector.load %arg3[%c0_8, %c0_9, %c0_10, %c0_11] : memref<1x4x8x128xf32, #tpu.memory_space<vmem>>, vector<1x4x8x128xf32>
      %18 = vector.shape_cast %17 : vector<1x4x8x128xf32> to vector<4x8x128xf32>
      %19 = tpu.iota {dimensions = array<i32: 0>} : vector<4x8x128xi32>
      %c0_i32_12 = arith.constant 0 : i32
      %20 = vector.broadcast %c0_i32_12 : i32 to vector<4x8x128xi32>
      %21 = arith.addi %20, %19 : vector<4x8x128xi32>
      %22 = vector.shape_cast %15 : vector<8x128xi32> to vector<1x8x128xi32>
      %23 = vector.broadcast %22 : vector<1x8x128xi32> to vector<4x8x128xi32>
      %24 = arith.cmpi eq, %21, %23 : vector<4x8x128xi32>
      %cst_13 = arith.constant 0.000000e+00 : f32
      %25 = vector.broadcast %cst_13 : f32 to vector<4x8x128xf32>
      %26 = arith.maximumf %18, %25 : vector<4x8x128xf32>
      %27 = math.absf %18 : vector<4x8x128xf32>
      %cst_14 = arith.constant 0.000000e+00 : f32
      %28 = vector.broadcast %cst_14 : f32 to vector<4x8x128xf32>
      %29 = arith.subf %28, %27 : vector<4x8x128xf32>
      %30 = math.exp %29 : vector<4x8x128xf32>
      %31 = math.log1p %30 : vector<4x8x128xf32>
      %32 = arith.addf %26, %31 : vector<4x8x128xf32>
      %cst_15 = arith.constant 0.000000e+00 : f32
      %33 = vector.broadcast %cst_15 : f32 to vector<4x8x128xf32>
      %34 = arith.select %24, %18, %33 : vector<4x8x128xi1>, vector<4x8x128xf32>
      %35 = arith.subf %32, %34 : vector<4x8x128xf32>
      %cst_16 = arith.constant dense<0.000000e+00> : vector<8x128xf32>
      %36 = vector.multi_reduction <add>, %35, %cst_16 [0] : vector<4x8x128xf32> to vector<8x128xf32>
      %37 = arith.addf %16, %36 : vector<8x128xf32>
      %c0_i32_17 = arith.constant 0 : i32
      %38 = vector.broadcast %c0_i32_17 : i32 to vector<8x128xi32>
      %39 = arith.cmpi sgt, %11, %38 : vector<8x128xi32>
      %40 = arith.extui %39 : vector<8x128xi1> to vector<8x128xi32>
      %41 = arith.addf %8, %37 : vector<8x128xf32>
      %42 = arith.addi %9, %40 : vector<8x128xi32>
      %c0_18 = arith.constant 0 : index
      %c0_19 = arith.constant 0 : index
      %c0_20 = arith.constant 0 : index
      %c0_21 = arith.constant 0 : index
      %43 = vector.load %arg5[%c0_18, %c0_19, %c0_20, %c0_21] : memref<1x1x8x128xf32, #tpu.memory_space<vmem>>, vector<1x1x8x128xf32>
      %44 = vector.shape_cast %43 : vector<1x1x8x128xf32> to vector<8x128xf32>
      %45 = arith.addf %44, %41 : vector<8x128xf32>
      %c0_22 = arith.constant 0 : index
      %c0_23 = arith.constant 0 : index
      %c0_24 = arith.constant 0 : index
      %c0_25 = arith.constant 0 : index
      %46 = vector.load %arg5[%c0_22, %c0_23, %c0_24, %c0_25] : memref<1x1x8x128xf32, #tpu.memory_space<vmem>>, vector<1x1x8x128xf32>
      %47 = vector.shape_cast %46 : vector<1x1x8x128xf32> to vector<8x128xf32>
      %48 = vector.shape_cast %45 : vector<8x128xf32> to vector<1x1x8x128xf32>
      tpu.vector_store %arg5[%c0_22, %c0_23, %c0_24, %c0_25], %48 {strides = array<i32>} : memref<1x1x8x128xf32, #tpu.memory_space<vmem>>, vector<1x1x8x128xf32>,
      %c0_26 = arith.constant 0 : index
      %c0_27 = arith.constant 0 : index
      %c0_28 = arith.constant 0 : index
      %c0_29 = arith.constant 0 : index
      %49 = vector.load %arg6[%c0_26, %c0_27, %c0_28, %c0_29] : memref<1x1x8x128xi32, #tpu.memory_space<vmem>>, vector<1x1x8x128xi32>
      %50 = vector.shape_cast %49 : vector<1x1x8x128xi32> to vector<8x128xi32>
      %51 = arith.addi %50, %42 : vector<8x128xi32>
      %c0_30 = arith.constant 0 : index
      %c0_31 = arith.constant 0 : index
      %c0_32 = arith.constant 0 : index
      %c0_33 = arith.constant 0 : index
      %52 = vector.load %arg6[%c0_30, %c0_31, %c0_32, %c0_33] : memref<1x1x8x128xi32, #tpu.memory_space<vmem>>, vector<1x1x8x128xi32>
      %53 = vector.shape_cast %52 : vector<1x1x8x128xi32> to vector<8x128xi32>
      %54 = vector.shape_cast %51 : vector<8x128xi32> to vector<1x1x8x128xi32>
      tpu.vector_store %arg6[%c0_30, %c0_31, %c0_32, %c0_33], %54 {strides = array<i32>} : memref<1x1x8x128xi32, #tpu.memory_space<vmem>>, vector<1x1x8x128xi32>,
    } else {
    }
    return
  }
  func.func @transform_0(%arg0: i32, %arg1: i32, %arg2: i32) -> (i32, i32, i32, i32) {
    %c1_i32 = arith.constant 1 : i32
    %0 = arith.muli %arg0, %c1_i32 : i32
    %1 = arith.addi %0, %arg2 : i32
    %c0_i32 = arith.constant 0 : i32
    %2 = arith.minsi %1, %c0_i32 : i32
    %c0_i32_0 = arith.constant 0 : i32
    %c0_i32_1 = arith.constant 0 : i32
    %c0_i32_2 = arith.constant 0 : i32
    return %arg1, %c0_i32_0, %2, %c0_i32_1 : i32, i32, i32, i32
  }
  func.func @transform_1(%arg0: i32, %arg1: i32, %arg2: i32) -> (i32, i32, i32) {
    %c1_i32 = arith.constant 1 : i32
    %0 = arith.muli %arg0, %c1_i32 : i32
    %1 = arith.addi %0, %arg2 : i32
    %c0_i32 = arith.constant 0 : i32
    %2 = arith.minsi %1, %c0_i32 : i32
    %c0_i32_0 = arith.constant 0 : i32
    %c0_i32_1 = arith.constant 0 : i32
    return %arg1, %2, %c0_i32_0 : i32, i32, i32
  }
  func.func @transform_2(%arg0: i32, %arg1: i32, %arg2: i32) -> (i32, i32, i32, i32) {
    %c0_i32 = arith.constant 0 : i32
    %c0_i32_0 = arith.constant 0 : i32
    %c0_i32_1 = arith.constant 0 : i32
    return %arg0, %arg1, %c0_i32, %c0_i32_0 : i32, i32, i32, i32
  }
  func.func @transform_3(%arg0: i32, %arg1: i32, %arg2: i32) -> (i32, i32, i32, i32) {
    %c0_i32 = arith.constant 0 : i32
    %c0_i32_0 = arith.constant 0 : i32
    %c0_i32_1 = arith.constant 0 : i32
    return %arg0, %arg1, %c0_i32, %c0_i32_0 : i32, i32, i32, i32
  }
}

</mosaic_0001>

<llo_original>
// kernel: tpu_custom_call.1
$region0: #{tpu_custom_call.1}
  #allocation0 [shape = 'u32[]', space=smem, size = 0x4, offset = 0x4, fixed_abs, tag = 'smem constant byte address 0x4 - core index']
  #allocation1 [shape = 'u32[144,128]{1,0:T(1,128)}', space=vmem, size = 0x12000, scoped, tag = 'internal scratch']
  %s0 = inlined_call_operand.hbm [shape: f32[2,4,8,128], index: 0, kind: input, shape index: {}]
  %s1 = inlined_call_operand.hbm [shape: s32[2,8,128], index: 1, kind: input, shape index: {}]
  %s2 = inlined_call_operand.hbm [shape: f32[2,2,8,128], index: 2, kind: output, shape index: {0}]
  %s3 = inlined_call_operand.hbm [shape: s32[2,2,8,128], index: 3, kind: output, shape index: {1}]
  %4 = xla_tuple %s2, %s3
  %s5 = sld [smem:[#allocation0]]
  $region65: #{tpu_custom_call.1} parent=0
    _
  %s7 = ssub.s32 1, %s5
  %s8 = scalar_select 0, %s7, %s5
  $region1: #{tpu_custom_call.1} parent=0
    #allocation2 [shape = 'u8[32768]{0}', space=vmem, size = 0x8000, scoped, tag = 'input window, operand 0']
    #allocation3 [shape = 's32[2]{0}', space=sflag, size = 0x8, scoped, tag = 'scoped memory for tpu_custom_call.1']
    #allocation4 [shape = 's32[2]{0}', space=sflag, size = 0x8, scoped, tag = 'scoped memory for tpu_custom_call.1']
    #allocation5 [shape = 'u8[8192]{0}', space=vmem, size = 0x2000, scoped, tag = 'input window, operand 1']
    #allocation6 [shape = 's32[2]{0}', space=sflag, size = 0x8, scoped, tag = 'scoped memory for tpu_custom_call.1']
    #allocation7 [shape = 'u8[8192]{0}', space=vmem, size = 0x2000, scoped, tag = 'output window, operand 0']
    #allocation8 [shape = 'u8[8192]{0}', space=vmem, size = 0x2000, scoped, tag = 'output window, operand 1']
    #allocation9 [shape = 's32[2]{0}', space=sflag, size = 0x8, scoped, tag = 'scoped memory for tpu_custom_call.1']
    %9 = vsyncpa [#allocation3], 0
    %s10 = scalar_lea.sflag [#allocation3], 1
    %11 = vsyncpa %s10, 0
    %12 = vsyncpa [#allocation6], 0
    %s13 = scalar_lea.sflag [#allocation6], 1
    %14 = vsyncpa %s13, 0
    %15 = vsyncpa [#allocation4], 0
    %s16 = scalar_lea.sflag [#allocation4], 1
    %17 = vsyncpa %s16, 0
    %18 = vsyncpa [#allocation9], 0
    %s19 = scalar_lea.sflag [#allocation9], 1
    %20 = vsyncpa %s19, 0
    loop: start=0, step=1, limit=6
    $region2: #{tpu_custom_call.1} parent=1 // loop_pre_header
      _
    $region3: #{tpu_custom_call.1} parent=1 // loop_header
      %s22 = sphi 0, %s26
      %p23 = scmp.ge.s32.totalorder %s22, 6
      %s29 = sphi 0, %s48
      %s30 = sphi 0, %s44
      %s31 = sphi 0, %s40
      %s32 = sphi 0, %s29
      %s33 = sphi 0, %s30
      %s34 = sphi 0, %s31
      %s35 = sphi 0, %s32
      %s36 = sphi 0, %s33
      %s37 = sphi 0, %s34
      %s59 = sphi 0, %s61
      %s62 = sphi 0, %s59
      %s63 = sphi 0, %s62
      %s79 = sphi 0, %s63
      %s93 = sphi 0, %s95
      %s96 = sphi 0, %s93
      %s97 = sphi 0, %s96
      %s113 = sphi 0, %s97
      %s121 = sphi 0, %s123
      %s124 = sphi 0, %s121
      %s125 = sphi 0, %s124
      %s141 = sphi 0, %s125
      %s149 = sphi 0, %s151
      %s152 = sphi 0, %s149
      %s153 = sphi 0, %s152
      %s169 = sphi 0, %s153
    $region4: #{tpu_custom_call.1} parent=1 // loop_header_branch
      %25 = sbr.rel (%p23) target = $region8
    $region5: #{tpu_custom_call.1} parent=1 // loop_body
      %s27 = ssub.s32 %s22, 1
      %s28 = ssub.s32 %s22, 2
      %s38 = sadd.s32 1, %s31
      %p39 = scmp.ge.s32.totalorder %s38, 1
      %s40 = scalar_select %p39, 0, %s38
      %s41 = sadd.s32 1, %s30
      %s42 = scalar_select %p39, %s41, %s30
      %p43 = scmp.ge.s32.totalorder %s42, 2
      %s44 = scalar_select %p43, 0, %s42
      %s45 = sadd.s32 1, %s29
      %s46 = scalar_select %p43, %s45, %s29
      %p47 = scmp.ge.s32.totalorder %s46, 2
      %s48 = scalar_select %p47, 0, %s46
      %s49 = sadd.s32 %s29, %s31
      %p50 = scmp.lt.s32.totalorder %s49, 0
      %s51 = scalar_select %p50, %s49, 0
      %s52 = sadd.s32 %s48, %s40
      %p53 = scmp.lt.s32.totalorder %s52, 0
      %s54 = scalar_select %p53, %s52, 0
      %s55 = ssub.s32 %s30, %s44
      %s56 = ssub.s32 %s51, %s54
      %s57 = sor.u32 %s55, %s56
      %p58 = scmp.eq.s32.totalorder %s57, 0
      %s60 = sadd.s32 %s59, 1
      %s61 = scalar_select %p58, %s59, %s60
      %p64 = pneg %p58
      %p65 = scmp.eq.s32.totalorder %s22, 3
      %p66 = por %p64, %p65
      %p67 = scmp.ne.s32.totalorder %s59, %s62
      %p68 = scmp.eq.s32.totalorder %s22, 0
      %p69 = por %p67, %p68
      %p70 = scmp.ne.s32.totalorder %s59, %s62
      %p71 = scmp.eq.s32.totalorder %s27, 3
      %p72 = por %p70, %p71
      %p73 = scmp.ne.s32.totalorder %s62, %s63
      %p74 = scmp.eq.s32.totalorder %s27, 0
      %p75 = por %p73, %p74
      %p76 = scmp.ne.s32.totalorder %s62, %s63
      %p77 = scmp.eq.s32.totalorder %s28, 3
      %p78 = por %p76, %p77
      %p80 = scmp.ne.s32.totalorder %s63, %s79
      %p81 = scmp.eq.s32.totalorder %s28, 0
      %p82 = por %p80, %p81
      %s83 = sadd.s32 %s29, %s31
      %p84 = scmp.lt.s32.totalorder %s83, 0
      %s85 = scalar_select %p84, %s83, 0
      %s86 = sadd.s32 %s48, %s40
      %p87 = scmp.lt.s32.totalorder %s86, 0
      %s88 = scalar_select %p87, %s86, 0
      %s89 = ssub.s32 %s30, %s44
      %s90 = ssub.s32 %s85, %s88
      %s91 = sor.u32 %s89, %s90
      %p92 = scmp.eq.s32.totalorder %s91, 0
      %s94 = sadd.s32 %s93, 1
      %s95 = scalar_select %p92, %s93, %s94
      %p98 = pneg %p92
      %p99 = scmp.eq.s32.totalorder %s22, 3
      %p100 = por %p98, %p99
      %p101 = scmp.ne.s32.totalorder %s93, %s96
      %p102 = scmp.eq.s32.totalorder %s22, 0
      %p103 = por %p101, %p102
      %p104 = scmp.ne.s32.totalorder %s93, %s96
      %p105 = scmp.eq.s32.totalorder %s27, 3
      %p106 = por %p104, %p105
      %p107 = scmp.ne.s32.totalorder %s96, %s97
      %p108 = scmp.eq.s32.totalorder %s27, 0
      %p109 = por %p107, %p108
      %p110 = scmp.ne.s32.totalorder %s96, %s97
      %p111 = scmp.eq.s32.totalorder %s28, 3
      %p112 = por %p110, %p111
      %p114 = scmp.ne.s32.totalorder %s97, %s113
      %p115 = scmp.eq.s32.totalorder %s28, 0
      %p116 = por %p114, %p115
      %s117 = ssub.s32 %s29, %s48
      %s118 = ssub.s32 %s30, %s44
      %s119 = sor.u32 %s117, %s118
      %p120 = scmp.eq.s32.totalorder %s119, 0
      %s122 = sadd.s32 %s121, 1
      %s123 = scalar_select %p120, %s121, %s122
      %p126 = pneg %p120
      %p127 = scmp.eq.s32.totalorder %s22, 3
      %p128 = por %p126, %p127
      %p129 = scmp.ne.s32.totalorder %s121, %s124
      %p130 = scmp.eq.s32.totalorder %s22, 0
      %p131 = por %p129, %p130
      %p132 = scmp.ne.s32.totalorder %s121, %s124
      %p133 = scmp.eq.s32.totalorder %s27, 3
      %p134 = por %p132, %p133
      %p135 = scmp.ne.s32.totalorder %s124, %s125
      %p136 = scmp.eq.s32.totalorder %s27, 0
      %p137 = por %p135, %p136
      %p138 = scmp.ne.s32.totalorder %s124, %s125
      %p139 = scmp.eq.s32.totalorder %s28, 3
      %p140 = por %p138, %p139
      %p142 = scmp.ne.s32.totalorder %s125, %s141
      %p143 = scmp.eq.s32.totalorder %s28, 0
      %p144 = por %p142, %p143
      %s145 = ssub.s32 %s29, %s48
      %s146 = ssub.s32 %s30, %s44
      %s147 = sor.u32 %s145, %s146
      %p148 = scmp.eq.s32.totalorder %s147, 0
      %s150 = sadd.s32 %s149, 1
      %s151 = scalar_select %p148, %s149, %s150
      %p154 = pneg %p148
      %p155 = scmp.eq.s32.totalorder %s22, 3
      %p156 = por %p154, %p155
      %p157 = scmp.ne.s32.totalorder %s149, %s152
      %p158 = scmp.eq.s32.totalorder %s22, 0
      %p159 = por %p157, %p158
      %p160 = scmp.ne.s32.totalorder %s149, %s152
      %p161 = scmp.eq.s32.totalorder %s27, 3
      %p162 = por %p160, %p161
      %p163 = scmp.ne.s32.totalorder %s152, %s153
      %p164 = scmp.eq.s32.totalorder %s27, 0
      %p165 = por %p163, %p164
      %p166 = scmp.ne.s32.totalorder %s152, %s153
      %p167 = scmp.eq.s32.totalorder %s28, 3
      %p168 = por %p166, %p167
      %p170 = scmp.ne.s32.totalorder %s153, %s169
      %p171 = scmp.eq.s32.totalorder %s28, 0
      %p172 = por %p170, %p171
      %p173 = scmp.le.s32.totalorder 1, %s22
      %p174 = scmp.lt.s32.totalorder %s22, 5
      %p175 = pnand %p173, %p174
      %p176 = pneg %p175
      // Predicated region
      $region9: #{tpu_custom_call.1} parent=5 // pred_check
        _
      $region10: #{tpu_custom_call.1} parent=5 // pred_check_branch
        %178 = sbr.rel (%p175) target = $region12
      $region11: #{tpu_custom_call.1} parent=5 // pred_region
        %s179 = ssub.s32 %s22, 1
      $region12: #{tpu_custom_call.1} parent=5 // pred_fallthru
        _
      %p180 = scmp.lt.s32.totalorder %s22, 4
      // Predicated region
      $region13: #{tpu_custom_call.1} parent=5 // pred_check
        %p181 = pneg %p180
      $region14: #{tpu_custom_call.1} parent=5 // pred_check_branch
        %183 = sbr.rel (%p181) target = $region16
      $region15: #{tpu_custom_call.1} parent=5 // pred_region
        // Predicated region
        $region17: #{tpu_custom_call.1} parent=15 // pred_check
          %p184 = pneg %p69
        $region18: #{tpu_custom_call.1} parent=15 // pred_check_branch
          %186 = sbr.rel (%p184) target = $region20
        $region19: #{tpu_custom_call.1} parent=15 // pred_region
          %s187 = sand.u32 %s59, 1
          %s188 = scalar_lea.sflag [#allocation3], %s187
          %s189 = sand.u32 %s59, 1
          %s190 = smul.addr %s189, 32
          %s191 = scalar_lea.vmem [#allocation2], %s190
          %s192 = sadd.s32 %s29, %s31
          %p193 = scmp.lt.s32.totalorder %s192, 0
          %s194 = scalar_select %p193, %s192, 0
          %s196 = ssub.s32 512, 512
          %197 = vsyncadd %s188, %s196
          %s198 = smul.addr %s30, 4
          %s199 = sadd.s32 %s194, %s198
          %s200 = smul.addr %s199, 128
          %s201 = scalar_lea.hbm %s0, %s200
          %s202 = sshll.u32 %s191, 4
          %s203 = int_to_ptr.vmem [resolvable:$true] %s202
          %208 = dma.hbm_to_vmem [thread:$0]  %s201, 512, %s203, %s188, 128, 128, 8
        $region20: #{tpu_custom_call.1} parent=15 // pred_fallthru
          _
        // Predicated region
        $region21: #{tpu_custom_call.1} parent=15 // pred_check
          %p209 = pneg %p103
        $region22: #{tpu_custom_call.1} parent=15 // pred_check_branch
          %211 = sbr.rel (%p209) target = $region24
        $region23: #{tpu_custom_call.1} parent=15 // pred_region
          %s212 = sand.u32 %s93, 1
          %s213 = scalar_lea.sflag [#allocation6], %s212
          %s214 = sand.u32 %s93, 1
          %s215 = smul.addr %s214, 8
          %s216 = scalar_lea.vmem [#allocation5], %s215
          %s217 = sadd.s32 %s29, %s31
          %p218 = scmp.lt.s32.totalorder %s217, 0
          %s219 = scalar_select %p218, %s217, 0
          %s221 = ssub.s32 128, 128
          %222 = vsyncadd %s213, %s221
          %s223 = sadd.s32 %s219, %s30
          %s224 = smul.addr %s223, 128
          %s225 = scalar_lea.hbm %s1, %s224
          %s227 = sshll.u32 %s216, 4
          %s228 = int_to_ptr.vmem [resolvable:$true] %s227
          %230 = dma.hbm_to_vmem [thread:$0]  %s225, 128, %s228, %s213
        $region24: #{tpu_custom_call.1} parent=15 // pred_fallthru
          _
      $region16: #{tpu_custom_call.1} parent=5 // pred_fallthru
        _
      %p231 = scmp.le.s32.totalorder 1, %s22
      %p232 = scmp.lt.s32.totalorder %s22, 5
      %p233 = pnand %p231, %p232
      %p234 = pneg %p233
      // Predicated region
      $region25: #{tpu_custom_call.1} parent=5 // pred_check
        _
      $region26: #{tpu_custom_call.1} parent=5 // pred_check_branch
        %236 = sbr.rel (%p233) target = $region28
      $region27: #{tpu_custom_call.1} parent=5 // pred_region
        %s237 = ssub.s32 %s22, 1
        %s238 = sand.u32 %s62, 1
        %s239 = scalar_lea.sflag [#allocation3], %s238
        %s240 = sand.u32 %s62, 1
        %s241 = smul.addr %s240, 32
        %s242 = scalar_lea.vmem [#allocation2], %s241
        // Predicated region
        $region29: #{tpu_custom_call.1} parent=27 // pred_check
          %p243 = pneg %p75
        $region30: #{tpu_custom_call.1} parent=27 // pred_check_branch
          %245 = sbr.rel (%p243) target = $region32
        $region31: #{tpu_custom_call.1} parent=27 // pred_region
          %246 = dma.done %s239, 512
        $region32: #{tpu_custom_call.1} parent=27 // pred_fallthru
          _
        %s247 = sand.u32 %s96, 1
        %s248 = scalar_lea.sflag [#allocation6], %s247
        %s249 = sand.u32 %s96, 1
        %s250 = smul.addr %s249, 8
        %s251 = scalar_lea.vmem [#allocation5], %s250
        // Predicated region
        $region33: #{tpu_custom_call.1} parent=27 // pred_check
          %p252 = pneg %p109
        $region34: #{tpu_custom_call.1} parent=27 // pred_check_branch
          %254 = sbr.rel (%p252) target = $region36
        $region35: #{tpu_custom_call.1} parent=27 // pred_region
          %255 = dma.done %s248, 128
        $region36: #{tpu_custom_call.1} parent=27 // pred_fallthru
          _
        %s256 = sand.u32 %s62, 1
        %s257 = scalar_lea.sflag [#allocation3], %s256
        %s258 = sand.u32 %s62, 1
        %s259 = smul.addr %s258, 32
        %s260 = scalar_lea.vmem [#allocation2], %s259
        %p261 = pneg %p75
        %p262 = pneg %p72
        %s263 = sand.u32 %s96, 1
        %s264 = scalar_lea.sflag [#allocation6], %s263
        %s265 = sand.u32 %s96, 1
        %s266 = smul.addr %s265, 8
        %s267 = scalar_lea.vmem [#allocation5], %s266
        %p268 = pneg %p109
        %p269 = pneg %p106
        %p270 = pneg %p137
        %p271 = pneg %p134
        %s272 = sand.u32 %s124, 1
        %s273 = scalar_lea.sflag [#allocation4], %s272
        %s274 = sand.u32 %s124, 1
        %s275 = smul.addr %s274, 8
        %s276 = scalar_lea.vmem [#allocation7], %s275
        %p277 = pneg %p165
        %p278 = pneg %p162
        %s279 = sand.u32 %s152, 1
        %s280 = scalar_lea.sflag [#allocation9], %s279
        %s281 = sand.u32 %s152, 1
        %s282 = smul.addr %s281, 8
        %s283 = scalar_lea.vmem [#allocation8], %s282
        %s284 = sadd.s32 %s32, %s34
        %p285 = scmp.lt.s32.totalorder %s284, 0
        %s286 = scalar_select %p285, %s284, 0
        %s287 = sadd.s32 %s32, %s34
        %p288 = scmp.lt.s32.totalorder %s287, 0
        %s289 = scalar_select %p288, %s287, 0
        %p290 = scmp.eq.s32.totalorder %s34, 0
        // Predicated region
        $region37: #{tpu_custom_call.1} parent=27 // pred_check
          %p291 = pneg %p290
        $region38: #{tpu_custom_call.1} parent=27 // pred_check_branch
          %293 = sbr.rel (%p291) target = $region40
        $region39: #{tpu_custom_call.1} parent=27 // pred_region
          %294 = vst [vmem:[%s276] sm:$0xff] 0.0
          %295 = vst [vmem:[%s283] sm:$0xff] 0
        $region40: #{tpu_custom_call.1} parent=27 // pred_fallthru
          _
        %s296 = sadd.s32 %s32, %s34
        %p297 = scmp.lt.s32.totalorder %s296, 1
        // Predicated region
        $region41: #{tpu_custom_call.1} parent=27 // pred_check
          %p298 = pneg %p297
        $region42: #{tpu_custom_call.1} parent=27 // pred_check_branch
          %300 = sbr.rel (%p298) target = $region44
        $region43: #{tpu_custom_call.1} parent=27 // pred_region
          %v301 = vld [vmem:[%s251] sm:$0xff]
          %vm302 = vcmp.gt.s32.totalorder %v301, 0
          %v303 = vsel %vm302, %v301, 0
          %vm304 = vcmp.lt.s32.totalorder %v303, 3
          %v305 = vsel %vm304, %v303, 3
          %v306 = vld [vmem:[%s242] sm:$0xff]
          %v307 = vld [vmem:[%s242 + $0x8] sm:$0xff]
          %v308 = vld [vmem:[%s242 + $0x10] sm:$0xff]
          %v309 = vld [vmem:[%s242 + $0x18] sm:$0xff]
          %vm310 = vcmp.eq.s32.totalorder %v305, 0
          %vm311 = vcmp.eq.s32.totalorder %v305, 1
          %vm312 = vcmp.eq.s32.totalorder %v305, 2
          %vm313 = vcmp.eq.s32.totalorder %v305, 3
          %v314 = vmax.f32 %v306, 0.0
          %v315 = vmax.f32 %v307, 0.0
          %v316 = vmax.f32 %v308, 0.0
          %v317 = vmax.f32 %v309, 0.0
          %v318 = vand.u32 2147483647, %v306
          %v319 = vand.u32 2147483647, %v307
          %v320 = vand.u32 2147483647, %v308
          %v321 = vand.u32 2147483647, %v309
          %v322 = vsub.f32 0.0, %v318
          %v323 = vsub.f32 0.0, %v319
          %v324 = vsub.f32 0.0, %v320
          %v325 = vsub.f32 0.0, %v321
          %v326 = vmul.f32 %v322, 1.442695
          %v327 = vpow.pop %v326
          %v328 = vmul.f32 %v323, 1.442695
          %v329 = vpow.pop %v328
          %v330 = vmul.f32 %v324, 1.442695
          %v331 = vpow.pop %v330
          %v332 = vmul.f32 %v325, 1.442695
          %v333 = vpow.pop %v332
          %v334 = vadd.f32 %v327, 1.0
          %v335 = vlog2.pop %v334
          %v336 = vmul.f32 %v335, 0.6931472
          %v337 = vmul.f32 -0.5, %v327
          %v338 = vadd.f32 %v337, 1.0
          %v339 = vmul.f32 %v338, %v327
          %v340 = vand.u32 2147483647, %v327
          %vm341 = vcmp.lt.f32.partialorder %v340, 0.0004427343
          %v342 = vsel %vm341, %v339, %v336
          %v343 = vadd.f32 %v329, 1.0
          %v344 = vlog2.pop %v343
          %v345 = vmul.f32 %v344, 0.6931472
          %v346 = vmul.f32 -0.5, %v329
          %v347 = vadd.f32 %v346, 1.0
          %v348 = vmul.f32 %v347, %v329
          %v349 = vand.u32 2147483647, %v329
          %vm350 = vcmp.lt.f32.partialorder %v349, 0.0004427343
          %v351 = vsel %vm350, %v348, %v345
          %v352 = vadd.f32 %v331, 1.0
          %v353 = vlog2.pop %v352
          %v354 = vmul.f32 %v353, 0.6931472
          %v355 = vmul.f32 -0.5, %v331
          %v356 = vadd.f32 %v355, 1.0
          %v357 = vmul.f32 %v356, %v331
          %v358 = vand.u32 2147483647, %v331
          %vm359 = vcmp.lt.f32.partialorder %v358, 0.0004427343
          %v360 = vsel %vm359, %v357, %v354
          %v361 = vadd.f32 %v333, 1.0
          %v362 = vlog2.pop %v361
          %v363 = vmul.f32 %v362, 0.6931472
          %v364 = vmul.f32 -0.5, %v333
          %v365 = vadd.f32 %v364, 1.0
          %v366 = vmul.f32 %v365, %v333
          %v367 = vand.u32 2147483647, %v333
          %vm368 = vcmp.lt.f32.partialorder %v367, 0.0004427343
          %v369 = vsel %vm368, %v366, %v363
          %v370 = vadd.f32 %v314, %v342
          %v371 = vadd.f32 %v315, %v351
          %v372 = vadd.f32 %v316, %v360
          %v373 = vadd.f32 %v317, %v369
          %v374 = vsel %vm310, %v306, 0.0
          %v375 = vsel %vm311, %v307, 0.0
          %v376 = vsel %vm312, %v308, 0.0
          %v377 = vsel %vm313, %v309, 0.0
          %v378 = vsub.f32 %v370, %v374
          %v379 = vsub.f32 %v371, %v375
          %v380 = vsub.f32 %v372, %v376
          %v381 = vsub.f32 %v373, %v377
          %v382 = vadd.f32 %v378, %v379
          %v383 = vadd.f32 %v382, %v380
          %v384 = vadd.f32 %v383, %v381
          %v385 = vadd.f32 %v384, 0.0
          %vm386 = vcmp.gt.s32.totalorder %v301, 0
          %v387 = vsel %vm386, 1, 0
          %v388 = vadd.f32 %v385, 0.0
          %v389 = vld [vmem:[%s276] sm:$0xff]
          %v390 = vadd.f32 %v389, %v388
          %391 = vst [vmem:[%s276] sm:$0xff] %v390
          %v392 = vld [vmem:[%s283] sm:$0xff]
          %v393 = vadd.s32 %v392, %v387
          %394 = vst [vmem:[%s283] sm:$0xff] %v393
        $region44: #{tpu_custom_call.1} parent=27 // pred_fallthru
          _
        %s395 = sand.u32 %s124, 1
        %s396 = scalar_lea.sflag [#allocation4], %s395
        %s397 = sand.u32 %s124, 1
        %s398 = smul.addr %s397, 8
        %s399 = scalar_lea.vmem [#allocation7], %s398
        %s400 = sand.u32 %s152, 1
        %s401 = scalar_lea.sflag [#allocation9], %s400
        %s402 = sand.u32 %s152, 1
        %s403 = smul.addr %s402, 8
        %s404 = scalar_lea.vmem [#allocation8], %s403
        // Predicated region
        $region45: #{tpu_custom_call.1} parent=27 // pred_check
          %p405 = pneg %p134
        $region46: #{tpu_custom_call.1} parent=27 // pred_check_branch
          %407 = sbr.rel (%p405) target = $region48
        $region47: #{tpu_custom_call.1} parent=27 // pred_region
          %s409 = ssub.s32 128, 128
          %410 = vsyncadd %s396, %s409
          %s411 = smul.addr %s32, 2
          %s412 = sadd.s32 %s33, %s411
          %s413 = smul.addr %s412, 128
          %s414 = scalar_lea.hbm %s2, %s413
          %s416 = sshll.u32 %s399, 4
          %s417 = int_to_ptr.vmem [resolvable:$true] %s416
          %419 = dma.vmem_to_hbm [thread:$0]  %s417, 128, %s414, %s396
        $region48: #{tpu_custom_call.1} parent=27 // pred_fallthru
          _
        // Predicated region
        $region49: #{tpu_custom_call.1} parent=27 // pred_check
          %p420 = pneg %p162
        $region50: #{tpu_custom_call.1} parent=27 // pred_check_branch
          %422 = sbr.rel (%p420) target = $region52
        $region51: #{tpu_custom_call.1} parent=27 // pred_region
          %s424 = ssub.s32 128, 128
          %425 = vsyncadd %s401, %s424
          %s426 = smul.addr %s32, 2
          %s427 = sadd.s32 %s33, %s426
          %s428 = smul.addr %s427, 128
          %s429 = scalar_lea.hbm %s3, %s428
          %s431 = sshll.u32 %s404, 4
          %s432 = int_to_ptr.vmem [resolvable:$true] %s431
          %434 = dma.vmem_to_hbm [thread:$0]  %s432, 128, %s429, %s401
        $region52: #{tpu_custom_call.1} parent=27 // pred_fallthru
          _
      $region28: #{tpu_custom_call.1} parent=5 // pred_fallthru
        _
      %p435 = scmp.le.s32.totalorder 2, %s22
      // Predicated region
      $region53: #{tpu_custom_call.1} parent=5 // pred_check
        %p436 = pneg %p435
      $region54: #{tpu_custom_call.1} parent=5 // pred_check_branch
        %438 = sbr.rel (%p436) target = $region56
      $region55: #{tpu_custom_call.1} parent=5 // pred_region
        %s439 = ssub.s32 %s22, 2
        // Predicated region
        $region57: #{tpu_custom_call.1} parent=55 // pred_check
          %p440 = pneg %p140
        $region58: #{tpu_custom_call.1} parent=55 // pred_check_branch
          %442 = sbr.rel (%p440) target = $region60
        $region59: #{tpu_custom_call.1} parent=55 // pred_region
          %s443 = sand.u32 %s125, 1
          %s444 = scalar_lea.sflag [#allocation4], %s443
          %s445 = sand.u32 %s125, 1
          %s446 = smul.addr %s445, 8
          %s447 = scalar_lea.vmem [#allocation7], %s446
          %448 = dma.done %s444, 128
        $region60: #{tpu_custom_call.1} parent=55 // pred_fallthru
          _
        // Predicated region
        $region61: #{tpu_custom_call.1} parent=55 // pred_check
          %p449 = pneg %p168
        $region62: #{tpu_custom_call.1} parent=55 // pred_check_branch
          %451 = sbr.rel (%p449) target = $region64
        $region63: #{tpu_custom_call.1} parent=55 // pred_region
          %s452 = sand.u32 %s153, 1
          %s453 = scalar_lea.sflag [#allocation9], %s452
          %s454 = sand.u32 %s153, 1
          %s455 = smul.addr %s454, 8
          %s456 = scalar_lea.vmem [#allocation8], %s455
          %457 = dma.done %s453, 128
        $region64: #{tpu_custom_call.1} parent=55 // pred_fallthru
          _
      $region56: #{tpu_custom_call.1} parent=5 // pred_fallthru
        _
    $region6: #{tpu_custom_call.1} parent=1 // loop_footer
      %s26 = sadd.s32 1, %s22
    $region7: #{tpu_custom_call.1} parent=1 // loop_footer_branch
      %21 = sbr.rel target = $region3
    $region8: #{tpu_custom_call.1} parent=1 // loop_exit
      _
    %458 = vsyncpa [#allocation3], 1
    %s459 = scalar_lea.sflag [#allocation3], 1
    %460 = vsyncpa %s459, 1
    %461 = vsyncpa [#allocation6], 1
    %s462 = scalar_lea.sflag [#allocation6], 1
    %463 = vsyncpa %s462, 1
    %464 = vsyncpa [#allocation4], 1
    %s465 = scalar_lea.sflag [#allocation4], 1
    %466 = vsyncpa %s465, 1
    %467 = vsyncpa [#allocation9], 1
    %s468 = scalar_lea.sflag [#allocation9], 1
    %469 = vsyncpa %s468, 1

</llo_original>
